<compile_context>
chip_gen: v7x
topology: tpu7x:2x2x1
jax: 0.10.0
libtpu: 0.0.40
codegen_flags: <defaults>
</compile_context>

<pallas_src>
import functools

import jax
import jax.numpy as jnp
from jax.experimental import pallas as pl
from jax.experimental.pallas import tpu as pltpu

HIDDEN = 256          # PPO_PARAMS['HIDDEN_SIZE']
LN_EPS = 1e-5         # torch.nn.LayerNorm default eps
OUT_W = 128           # lane-dense output slab width (>= num_actions + 1)
NEG = -1e30           # softmax mask value baked into the padded logit bias
DEFAULT_TB = 256      # batch tile for v6e/v7x (2x256^2 MXU); use tb=128 on v5e
MIN_SPLIT_B = 128     # batches >= this get split into >=2 tiles (feed both v7x TCs)


def _round_up(x, m):
    return (x + m - 1) // m * m


def _layernorm(h, gamma, beta):
    # Single-pass statistics: mean and mean-of-squares are independent XLU
    # reductions; var = E[h^2] - mean^2 (clamped for numerical safety).
    mean = jnp.mean(h, axis=-1, keepdims=True)
    msq = jnp.mean(h * h, axis=-1, keepdims=True)
    var = jnp.maximum(msq - mean * mean, 0.0)
    return (h - mean) * jax.lax.rsqrt(var + LN_EPS) * gamma + beta


# ------------------------------- kernel --------------------------------------

def ppo_kernel(x_ref, w1_ref, w2_ref, w3_ref, wh1_ref, wa2_ref, vec_ref, out_ref):
    x = x_ref[...]                       # (TB, input_size) f32
    vec = vec_ref[...]                   # (16, 256) f32 packed small vectors

    b1, g1, be1 = vec[0:1, :], vec[1:2, :], vec[2:3, :]
    b2, g2, be2 = vec[3:4, :], vec[4:5, :], vec[5:6, :]
    b3, g3, be3 = vec[6:7, :OUT_W], vec[7:8, :OUT_W], vec[8:9, :OUT_W]
    bh1 = vec[9:10, :OUT_W]              # fused [actor_b1 | critic_b1]
    ab2 = vec[10:11, :OUT_W]             # actor out bias; lanes >= A hold NEG (mask)
    cw2 = vec[11:12, :OUT_W]             # critic out weight; lanes 0..63 are zero
    cb2 = vec[12:13, 0:1]                # (1, 1) critic out bias
    vmask = vec[13:14, :OUT_W]           # one-hot 1.0 at lane == num_actions

    bf16 = jnp.bfloat16

    # ---- shared trunk: 3 x (Linear + LayerNorm + ReLU); bf16 MXU, f32 acc ----
    h = jnp.dot(x.astype(bf16), w1_ref[...],
                preferred_element_type=jnp.float32) + b1
    h = jnp.maximum(_layernorm(h, g1, be1), 0.0)

    h = jnp.dot(h.astype(bf16), w2_ref[...],
                preferred_element_type=jnp.float32) + b2
    h = jnp.maximum(_layernorm(h, g2, be2), 0.0)

    h = jnp.dot(h.astype(bf16), w3_ref[...],
                preferred_element_type=jnp.float32) + b3
    feat = jnp.maximum(_layernorm(h, g3, be3), 0.0)           # (TB, 128)

    # ---- fused actor/critic hidden layer: lanes 0..63 actor, 64..127 critic ----
    hc = jnp.dot(feat.astype(bf16), wh1_ref[...],
                 preferred_element_type=jnp.float32) + bh1
    hc = jnp.maximum(hc, 0.0)                                 # (TB, 128)

    # ---- actor logits: wa2 rows 64..127 (critic lanes) are zero, so critic
    #      lanes contribute 0; unused logit lanes get NEG via the packed bias. ----
    logits = jnp.dot(hc.astype(bf16), wa2_ref[...],
                     preferred_element_type=jnp.float32) + ab2
    logits = logits - jnp.max(logits, axis=-1, keepdims=True)
    e = jnp.exp(logits)
    probs = e / jnp.sum(e, axis=-1, keepdims=True)            # exact normalization

    # ---- critic value: VPU multiply + lane reduce (cw2 lanes 0..63 are zero) ----
    value = jnp.sum(hc * cw2, axis=-1, keepdims=True) + cb2   # (TB, 1)

    # ---- lane-dense packed output: probs in lanes 0..A-1, value in lane A ----
    out_ref[...] = jnp.where(vmask > 0.0, value, probs)


# ------------------------------- wrapper --------------------------------------

def _select_tb(batch, tb):
    if batch > tb:
        return tb
    if batch >= MIN_SPLIT_B:
        # Keep >= 2 grid steps so both v7x TensorCores get work.
        return _round_up((batch + 1) // 2, 8)
    return _round_up(max(batch, 1), 8)


def ppo_forward(x, packed, num_actions, tb=DEFAULT_TB):
    B, input_size = x.shape
    TB = _select_tb(B, tb)
    B_pad = _round_up(B, TB)
    if B_pad != B:
        x = jnp.pad(x, ((0, B_pad - B), (0, 0)))

    w1t, w2t, w3t, wh1, wa2p, vec = packed

    # Constant (0, 0) index_map => operand stays VMEM-resident across grid steps.
    resident = lambda shape: pl.BlockSpec(shape, lambda i: (0, 0))

    out = pl.pallas_call(
        ppo_kernel,
        out_shape=jax.ShapeDtypeStruct((B_pad, OUT_W), jnp.float32),
        grid=(B_pad // TB,),
        in_specs=[
            pl.BlockSpec((TB, input_size), lambda i: (i, 0)),   # activations stream
            resident(w1t.shape),
            resident(w2t.shape),
            resident(w3t.shape),
            resident(wh1.shape),
            resident(wa2p.shape),
            resident(vec.shape),
        ],
        out_specs=pl.BlockSpec((TB, OUT_W), lambda i: (i, 0)),
        compiler_params=pltpu.CompilerParams(
            dimension_semantics=("parallel",)),
    )(x, w1t, w2t, w3t, wh1, wa2p, vec)

    probs = out[:B, :num_actions]
    value = out[:B, num_actions:num_actions + 1]
    return probs, value


# ----------------------- deterministic parameter init -------------------------

def _orthogonal(key, out_dim, in_dim, gain=0.1):
    """torch.nn.init.orthogonal_-style init (gain * orthogonal matrix)."""
    rows, cols = max(out_dim, in_dim), min(out_dim, in_dim)
    a = jax.random.normal(key, (rows, cols), dtype=jnp.float32)
    q, r = jnp.linalg.qr(a)
    q = q * jnp.sign(jnp.diag(r))
    if out_dim < in_dim:
        q = q.T
    return (gain * q[:out_dim, :in_dim]).astype(jnp.float32)


def _linear(key, in_dim, out_dim):
    w = _orthogonal(key, out_dim, in_dim, gain=0.1)   # torch layout (out, in)
    wt = jnp.asarray(w.T)                             # (in, out) for x @ Wt
    b = jnp.zeros((1, out_dim), jnp.float32)
    return wt, b


def init_params(key, input_size, num_actions, hidden=HIDDEN):
    ks = jax.random.split(key, 7)
    w1, b1 = _linear(ks[0], input_size, hidden)
    w2, b2 = _linear(ks[1], hidden, hidden)
    w3, b3 = _linear(ks[2], hidden, hidden // 2)
    aw1, ab1 = _linear(ks[3], hidden // 2, hidden // 4)
    aw2, ab2 = _linear(ks[4], hidden // 4, num_actions)
    cw1, cb1 = _linear(ks[5], hidden // 2, hidden // 4)
    cw2, cb2 = _linear(ks[6], hidden // 4, 1)
    g1 = jnp.ones((1, hidden), jnp.float32); be1 = jnp.zeros((1, hidden), jnp.float32)
    g2 = jnp.ones((1, hidden), jnp.float32); be2 = jnp.zeros((1, hidden), jnp.float32)
    g3 = jnp.ones((1, hidden // 2), jnp.float32); be3 = jnp.zeros((1, hidden // 2), jnp.float32)
    return (w1, b1, g1, be1,
            w2, b2, g2, be2,
            w3, b3, g3, be3,
            aw1, ab1, aw2, ab2,
            cw1, cb1, cw2, cb2)


def pack_params(params, num_actions, hidden=HIDDEN):
    """Pack torch-semantics params into the kernel operand set (weights bf16)."""
    (w1, b1, g1, be1, w2, b2, g2, be2, w3, b3, g3, be3,
     aw1, ab1, aw2, ab2, cw1, cb1, cw2, cb2) = params
    assert num_actions + 1 <= OUT_W

    # fused actor/critic first head layer: (128, 128)
    wh1 = jnp.concatenate([aw1, cw1], axis=1)

    # actor output weight zero-padded to (128, 128); rows >= 64 (critic lanes) zero.
    wa2p = jnp.zeros((hidden // 2, OUT_W), jnp.float32)
    wa2p = wa2p.at[: hidden // 4, :num_actions].set(aw2)

    # packed small f32 vectors: (16, 256) -> one DMA instead of ~15 tiny ones.
    vec = jnp.zeros((16, hidden), jnp.float32)
    vec = vec.at[0, :].set(b1[0])
    vec = vec.at[1, :].set(g1[0])
    vec = vec.at[2, :].set(be1[0])
    vec = vec.at[3, :].set(b2[0])
    vec = vec.at[4, :].set(g2[0])
    vec = vec.at[5, :].set(be2[0])
    vec = vec.at[6, :hidden // 2].set(b3[0])
    vec = vec.at[7, :hidden // 2].set(g3[0])
    vec = vec.at[8, :hidden // 2].set(be3[0])
    vec = vec.at[9, :hidden // 4].set(ab1[0])
    vec = vec.at[9, hidden // 4:hidden // 2].set(cb1[0])
    vec = vec.at[10, :hidden // 2].set(NEG)             # softmax mask on unused lanes
    vec = vec.at[10, :num_actions].set(ab2[0])
    vec = vec.at[11, hidden // 4:hidden // 2].set(cw2[:, 0])
    vec = vec.at[12, 0].set(cb2[0, 0])
    vec = vec.at[13, num_actions].set(1.0)               # one-hot value-lane selector

    bf16 = jnp.bfloat16
    return (w1.astype(bf16), w2.astype(bf16), w3.astype(bf16),
            wh1.astype(bf16), wa2p.astype(bf16), vec)


# ------------------------------ pure-JAX reference ----------------------------

def ppo_reference(x, params):
    (w1, b1, g1, be1, w2, b2, g2, be2, w3, b3, g3, be3,
     aw1, ab1, aw2, ab2, cw1, cb1, cw2, cb2) = params
    h = jnp.maximum(_layernorm(x @ w1 + b1, g1, be1), 0.0)
    h = jnp.maximum(_layernorm(h @ w2 + b2, g2, be2), 0.0)
    feat = jnp.maximum(_layernorm(h @ w3 + b3, g3, be3), 0.0)
    logits = jnp.maximum(feat @ aw1 + ab1, 0.0) @ aw2 + ab2
    probs = jax.nn.softmax(logits, axis=-1)
    value = jnp.maximum(feat @ cw1 + cb1, 0.0) @ cw2 + cb2
    return probs, value


if __name__ == "__main__":
    key = jax.random.PRNGKey(0)
    kx, kx2, kp = jax.random.split(key, 3)

    input_size = 16
    num_actions = 4

    params = init_params(kp, input_size, num_actions)
    packed = pack_params(params, num_actions)

    fwd = jax.jit(functools.partial(ppo_forward, num_actions=num_actions))

    # small batch: single 8-row tile
    batch = 8
    x = jax.random.normal(kx, (batch, input_size), dtype=jnp.float32)
    probs, value = fwd(x, packed)
    jax.block_until_ready((probs, value))

    ref_probs, ref_value = ppo_reference(x, params)
    assert probs.shape == (batch, num_actions) and value.shape == (batch, 1)
    # bf16 MXU operands vs f32 reference -> relaxed tolerances
    assert jnp.allclose(probs, ref_probs, atol=5e-3, rtol=2e-2)
    assert jnp.allclose(value, ref_value, atol=5e-3, rtol=2e-2)
    assert jnp.allclose(jnp.sum(probs, axis=-1), 1.0, atol=2e-3)

    # larger batch: exercises the grid (2 tiles) + padded rows in the last tile
    batch2 = 200
    x2 = jax.random.normal(kx2, (batch2, input_size), dtype=jnp.float32)
    probs2, value2 = fwd(x2, packed)
    jax.block_until_ready((probs2, value2))
    ref_probs2, ref_value2 = ppo_reference(x2, params)
    assert probs2.shape == (batch2, num_actions) and value2.shape == (batch2, 1)
    assert jnp.allclose(probs2, ref_probs2, atol=5e-3, rtol=2e-2)
    assert jnp.allclose(value2, ref_value2, atol=5e-3, rtol=2e-2)
    assert jnp.allclose(jnp.sum(probs2, axis=-1), 1.0, atol=2e-3)

    print("KERNEL_OK")
</pallas_src>

<mosaic_0001>
module attributes {stable_mosaic.version = 11 : i64} {
  func.func @ppo_kernel(%arg0: i32, %arg1: memref<8x16xf32, #tpu.memory_space<vmem>>, %arg2: memref<16x256xbf16, #tpu.memory_space<vmem>>, %arg3: memref<256x256xbf16, #tpu.memory_space<vmem>>, %arg4: memref<256x128xbf16, #tpu.memory_space<vmem>>, %arg5: memref<128x128xbf16, #tpu.memory_space<vmem>>, %arg6: memref<128x128xbf16, #tpu.memory_space<vmem>>, %arg7: memref<16x256xf32, #tpu.memory_space<vmem>>, %arg8: memref<8x128xf32, #tpu.memory_space<vmem>>) attributes {dimension_semantics = [#tpu.dimension_semantics<parallel>], iteration_bounds = array<i64: 1>, scalar_prefetch = 0 : i64, scratch_operands = 0 : i64, tpu.core_type = #tpu.core_type<tc>, window_params = [{transform_indices = @transform_0, window_bounds = array<i64: 8, 16>}, {pipeline_mode = #tpu.pipeline_mode<synchronous>, transform_indices = @transform_1, window_bounds = array<i64: 16, 256>}, {pipeline_mode = #tpu.pipeline_mode<synchronous>, transform_indices = @transform_2, window_bounds = array<i64: 256, 256>}, {pipeline_mode = #tpu.pipeline_mode<synchronous>, transform_indices = @transform_3, window_bounds = array<i64: 256, 128>}, {pipeline_mode = #tpu.pipeline_mode<synchronous>, transform_indices = @transform_4, window_bounds = array<i64: 128, 128>}, {pipeline_mode = #tpu.pipeline_mode<synchronous>, transform_indices = @transform_5, window_bounds = array<i64: 128, 128>}, {pipeline_mode = #tpu.pipeline_mode<synchronous>, transform_indices = @transform_6, window_bounds = array<i64: 16, 256>}, {transform_indices = @transform_7, window_bounds = array<i64: 8, 128>}]} {
    %c0 = arith.constant 0 : index
    %c0_0 = arith.constant 0 : index
    %0 = vector.load %arg1[%c0, %c0_0] : memref<8x16xf32, #tpu.memory_space<vmem>>, vector<8x16xf32>
    %c0_1 = arith.constant 0 : index
    %c0_2 = arith.constant 0 : index
    %1 = vector.load %arg7[%c0_1, %c0_2] : memref<16x256xf32, #tpu.memory_space<vmem>>, vector<16x256xf32>
    %2 = vector.extract_strided_slice %1 {offsets = [0, 0], sizes = [1, 256], strides = [1, 1]} : vector<16x256xf32> to vector<1x256xf32>
    %3 = vector.extract_strided_slice %1 {offsets = [1, 0], sizes = [1, 256], strides = [1, 1]} : vector<16x256xf32> to vector<1x256xf32>
    %4 = vector.extract_strided_slice %1 {offsets = [2, 0], sizes = [1, 256], strides = [1, 1]} : vector<16x256xf32> to vector<1x256xf32>
    %5 = vector.extract_strided_slice %1 {offsets = [3, 0], sizes = [1, 256], strides = [1, 1]} : vector<16x256xf32> to vector<1x256xf32>
    %6 = vector.extract_strided_slice %1 {offsets = [4, 0], sizes = [1, 256], strides = [1, 1]} : vector<16x256xf32> to vector<1x256xf32>
    %7 = vector.extract_strided_slice %1 {offsets = [5, 0], sizes = [1, 256], strides = [1, 1]} : vector<16x256xf32> to vector<1x256xf32>
    %8 = vector.extract_strided_slice %1 {offsets = [6, 0], sizes = [1, 128], strides = [1, 1]} : vector<16x256xf32> to vector<1x128xf32>
    %9 = vector.extract_strided_slice %1 {offsets = [7, 0], sizes = [1, 128], strides = [1, 1]} : vector<16x256xf32> to vector<1x128xf32>
    %10 = vector.extract_strided_slice %1 {offsets = [8, 0], sizes = [1, 128], strides = [1, 1]} : vector<16x256xf32> to vector<1x128xf32>
    %11 = vector.extract_strided_slice %1 {offsets = [9, 0], sizes = [1, 128], strides = [1, 1]} : vector<16x256xf32> to vector<1x128xf32>
    %12 = vector.extract_strided_slice %1 {offsets = [10, 0], sizes = [1, 128], strides = [1, 1]} : vector<16x256xf32> to vector<1x128xf32>
    %13 = vector.extract_strided_slice %1 {offsets = [11, 0], sizes = [1, 128], strides = [1, 1]} : vector<16x256xf32> to vector<1x128xf32>
    %14 = vector.extract_strided_slice %1 {offsets = [12, 0], sizes = [1, 1], strides = [1, 1]} : vector<16x256xf32> to vector<1x1xf32>
    %15 = vector.extract_strided_slice %1 {offsets = [13, 0], sizes = [1, 128], strides = [1, 1]} : vector<16x256xf32> to vector<1x128xf32>
    %16 = arith.truncf %0 : vector<8x16xf32> to vector<8x16xbf16>
    %c0_3 = arith.constant 0 : index
    %c0_4 = arith.constant 0 : index
    %17 = vector.load %arg2[%c0_3, %c0_4] : memref<16x256xbf16, #tpu.memory_space<vmem>>, vector<16x256xbf16>
    %cst = arith.constant dense<0.000000e+00> : vector<8x256xf32>
    %18 = tpu.matmul %16, %17, %cst {dimension_numbers = #tpu.dot_dimension_numbers<[1], [0], [0], [1], [0, 0, 1, 1], [], []>} : vector<8x16xbf16>, vector<16x256xbf16>, vector<8x256xf32> -> vector<8x256xf32>
    %19 = vector.broadcast %2 : vector<1x256xf32> to vector<8x256xf32>
    %20 = arith.addf %18, %19 : vector<8x256xf32>
    %cst_5 = arith.constant dense<0.000000e+00> : vector<8xf32>
    %21 = vector.multi_reduction <add>, %20, %cst_5 [1] : vector<8x256xf32> to vector<8xf32>
    %22 = vector.shape_cast %21 : vector<8xf32> to vector<8x1xf32>
    %cst_6 = arith.constant 2.560000e+02 : f32
    %23 = vector.broadcast %cst_6 : f32 to vector<8x1xf32>
    %24 = arith.divf %22, %23 : vector<8x1xf32>
    %25 = arith.mulf %20, %20 : vector<8x256xf32>
    %cst_7 = arith.constant dense<0.000000e+00> : vector<8xf32>
    %26 = vector.multi_reduction <add>, %25, %cst_7 [1] : vector<8x256xf32> to vector<8xf32>
    %27 = vector.shape_cast %26 : vector<8xf32> to vector<8x1xf32>
    %cst_8 = arith.constant 2.560000e+02 : f32
    %28 = vector.broadcast %cst_8 : f32 to vector<8x1xf32>
    %29 = arith.divf %27, %28 : vector<8x1xf32>
    %30 = arith.mulf %24, %24 : vector<8x1xf32>
    %31 = arith.subf %29, %30 : vector<8x1xf32>
    %cst_9 = arith.constant 0.000000e+00 : f32
    %32 = vector.broadcast %cst_9 : f32 to vector<8x1xf32>
    %33 = arith.maximumf %31, %32 : vector<8x1xf32>
    %34 = vector.broadcast %24 : vector<8x1xf32> to vector<8x256xf32>
    %35 = arith.subf %20, %34 : vector<8x256xf32>
    %cst_10 = arith.constant 9.99999974E-6 : f32
    %36 = vector.broadcast %cst_10 : f32 to vector<8x1xf32>
    %37 = arith.addf %33, %36 : vector<8x1xf32>
    %38 = math.rsqrt %37 : vector<8x1xf32>
    %39 = vector.broadcast %38 : vector<8x1xf32> to vector<8x256xf32>
    %40 = arith.mulf %35, %39 : vector<8x256xf32>
    %41 = vector.broadcast %3 : vector<1x256xf32> to vector<8x256xf32>
    %42 = arith.mulf %40, %41 : vector<8x256xf32>
    %43 = vector.broadcast %4 : vector<1x256xf32> to vector<8x256xf32>
    %44 = arith.addf %42, %43 : vector<8x256xf32>
    %cst_11 = arith.constant 0.000000e+00 : f32
    %45 = vector.broadcast %cst_11 : f32 to vector<8x256xf32>
    %46 = arith.maximumf %44, %45 : vector<8x256xf32>
    %47 = arith.truncf %46 : vector<8x256xf32> to vector<8x256xbf16>
    %c0_12 = arith.constant 0 : index
    %c0_13 = arith.constant 0 : index
    %48 = vector.load %arg3[%c0_12, %c0_13] : memref<256x256xbf16, #tpu.memory_space<vmem>>, vector<256x256xbf16>
    %cst_14 = arith.constant dense<0.000000e+00> : vector<8x256xf32>
    %49 = tpu.matmul %47, %48, %cst_14 {dimension_numbers = #tpu.dot_dimension_numbers<[1], [0], [0], [1], [0, 0, 1, 1], [], []>} : vector<8x256xbf16>, vector<256x256xbf16>, vector<8x256xf32> -> vector<8x256xf32>
    %50 = vector.broadcast %5 : vector<1x256xf32> to vector<8x256xf32>
    %51 = arith.addf %49, %50 : vector<8x256xf32>
    %cst_15 = arith.constant dense<0.000000e+00> : vector<8xf32>
    %52 = vector.multi_reduction <add>, %51, %cst_15 [1] : vector<8x256xf32> to vector<8xf32>
    %53 = vector.shape_cast %52 : vector<8xf32> to vector<8x1xf32>
    %cst_16 = arith.constant 2.560000e+02 : f32
    %54 = vector.broadcast %cst_16 : f32 to vector<8x1xf32>
    %55 = arith.divf %53, %54 : vector<8x1xf32>
    %56 = arith.mulf %51, %51 : vector<8x256xf32>
    %cst_17 = arith.constant dense<0.000000e+00> : vector<8xf32>
    %57 = vector.multi_reduction <add>, %56, %cst_17 [1] : vector<8x256xf32> to vector<8xf32>
    %58 = vector.shape_cast %57 : vector<8xf32> to vector<8x1xf32>
    %cst_18 = arith.constant 2.560000e+02 : f32
    %59 = vector.broadcast %cst_18 : f32 to vector<8x1xf32>
    %60 = arith.divf %58, %59 : vector<8x1xf32>
    %61 = arith.mulf %55, %55 : vector<8x1xf32>
    %62 = arith.subf %60, %61 : vector<8x1xf32>
    %cst_19 = arith.constant 0.000000e+00 : f32
    %63 = vector.broadcast %cst_19 : f32 to vector<8x1xf32>
    %64 = arith.maximumf %62, %63 : vector<8x1xf32>
    %65 = vector.broadcast %55 : vector<8x1xf32> to vector<8x256xf32>
    %66 = arith.subf %51, %65 : vector<8x256xf32>
    %cst_20 = arith.constant 9.99999974E-6 : f32
    %67 = vector.broadcast %cst_20 : f32 to vector<8x1xf32>
    %68 = arith.addf %64, %67 : vector<8x1xf32>
    %69 = math.rsqrt %68 : vector<8x1xf32>
    %70 = vector.broadcast %69 : vector<8x1xf32> to vector<8x256xf32>
    %71 = arith.mulf %66, %70 : vector<8x256xf32>
    %72 = vector.broadcast %6 : vector<1x256xf32> to vector<8x256xf32>
    %73 = arith.mulf %71, %72 : vector<8x256xf32>
    %74 = vector.broadcast %7 : vector<1x256xf32> to vector<8x256xf32>
    %75 = arith.addf %73, %74 : vector<8x256xf32>
    %cst_21 = arith.constant 0.000000e+00 : f32
    %76 = vector.broadcast %cst_21 : f32 to vector<8x256xf32>
    %77 = arith.maximumf %75, %76 : vector<8x256xf32>
    %78 = arith.truncf %77 : vector<8x256xf32> to vector<8x256xbf16>
    %c0_22 = arith.constant 0 : index
    %c0_23 = arith.constant 0 : index
    %79 = vector.load %arg4[%c0_22, %c0_23] : memref<256x128xbf16, #tpu.memory_space<vmem>>, vector<256x128xbf16>
    %cst_24 = arith.constant dense<0.000000e+00> : vector<8x128xf32>
    %80 = tpu.matmul %78, %79, %cst_24 {dimension_numbers = #tpu.dot_dimension_numbers<[1], [0], [0], [1], [0, 0, 1, 1], [], []>} : vector<8x256xbf16>, vector<256x128xbf16>, vector<8x128xf32> -> vector<8x128xf32>
    %81 = vector.broadcast %8 : vector<1x128xf32> to vector<8x128xf32>
    %82 = arith.addf %80, %81 : vector<8x128xf32>
    %cst_25 = arith.constant dense<0.000000e+00> : vector<8xf32>
    %83 = vector.multi_reduction <add>, %82, %cst_25 [1] : vector<8x128xf32> to vector<8xf32>
    %84 = vector.shape_cast %83 : vector<8xf32> to vector<8x1xf32>
    %cst_26 = arith.constant 1.280000e+02 : f32
    %85 = vector.broadcast %cst_26 : f32 to vector<8x1xf32>
    %86 = arith.divf %84, %85 : vector<8x1xf32>
    %87 = arith.mulf %82, %82 : vector<8x128xf32>
    %cst_27 = arith.constant dense<0.000000e+00> : vector<8xf32>
    %88 = vector.multi_reduction <add>, %87, %cst_27 [1] : vector<8x128xf32> to vector<8xf32>
    %89 = vector.shape_cast %88 : vector<8xf32> to vector<8x1xf32>
    %cst_28 = arith.constant 1.280000e+02 : f32
    %90 = vector.broadcast %cst_28 : f32 to vector<8x1xf32>
    %91 = arith.divf %89, %90 : vector<8x1xf32>
    %92 = arith.mulf %86, %86 : vector<8x1xf32>
    %93 = arith.subf %91, %92 : vector<8x1xf32>
    %cst_29 = arith.constant 0.000000e+00 : f32
    %94 = vector.broadcast %cst_29 : f32 to vector<8x1xf32>
    %95 = arith.maximumf %93, %94 : vector<8x1xf32>
    %96 = vector.broadcast %86 : vector<8x1xf32> to vector<8x128xf32>
    %97 = arith.subf %82, %96 : vector<8x128xf32>
    %cst_30 = arith.constant 9.99999974E-6 : f32
    %98 = vector.broadcast %cst_30 : f32 to vector<8x1xf32>
    %99 = arith.addf %95, %98 : vector<8x1xf32>
    %100 = math.rsqrt %99 : vector<8x1xf32>
    %101 = vector.broadcast %100 : vector<8x1xf32> to vector<8x128xf32>
    %102 = arith.mulf %97, %101 : vector<8x128xf32>
    %103 = vector.broadcast %9 : vector<1x128xf32> to vector<8x128xf32>
    %104 = arith.mulf %102, %103 : vector<8x128xf32>
    %105 = vector.broadcast %10 : vector<1x128xf32> to vector<8x128xf32>
    %106 = arith.addf %104, %105 : vector<8x128xf32>
    %cst_31 = arith.constant 0.000000e+00 : f32
    %107 = vector.broadcast %cst_31 : f32 to vector<8x128xf32>
    %108 = arith.maximumf %106, %107 : vector<8x128xf32>
    %109 = arith.truncf %108 : vector<8x128xf32> to vector<8x128xbf16>
    %c0_32 = arith.constant 0 : index
    %c0_33 = arith.constant 0 : index
    %110 = vector.load %arg5[%c0_32, %c0_33] : memref<128x128xbf16, #tpu.memory_space<vmem>>, vector<128x128xbf16>
    %cst_34 = arith.constant dense<0.000000e+00> : vector<8x128xf32>
    %111 = tpu.matmul %109, %110, %cst_34 {dimension_numbers = #tpu.dot_dimension_numbers<[1], [0], [0], [1], [0, 0, 1, 1], [], []>} : vector<8x128xbf16>, vector<128x128xbf16>, vector<8x128xf32> -> vector<8x128xf32>
    %112 = vector.broadcast %11 : vector<1x128xf32> to vector<8x128xf32>
    %113 = arith.addf %111, %112 : vector<8x128xf32>
    %cst_35 = arith.constant 0.000000e+00 : f32
    %114 = vector.broadcast %cst_35 : f32 to vector<8x128xf32>
    %115 = arith.maximumf %113, %114 : vector<8x128xf32>
    %116 = arith.truncf %115 : vector<8x128xf32> to vector<8x128xbf16>
    %c0_36 = arith.constant 0 : index
    %c0_37 = arith.constant 0 : index
    %117 = vector.load %arg6[%c0_36, %c0_37] : memref<128x128xbf16, #tpu.memory_space<vmem>>, vector<128x128xbf16>
    %cst_38 = arith.constant dense<0.000000e+00> : vector<8x128xf32>
    %118 = tpu.matmul %116, %117, %cst_38 {dimension_numbers = #tpu.dot_dimension_numbers<[1], [0], [0], [1], [0, 0, 1, 1], [], []>} : vector<8x128xbf16>, vector<128x128xbf16>, vector<8x128xf32> -> vector<8x128xf32>
    %119 = vector.broadcast %12 : vector<1x128xf32> to vector<8x128xf32>
    %120 = arith.addf %118, %119 : vector<8x128xf32>
    %cst_39 = arith.constant dense<0xFF800000> : vector<8xf32>
    %121 = vector.multi_reduction <maximumf>, %120, %cst_39 [1] : vector<8x128xf32> to vector<8xf32>
    %122 = vector.shape_cast %121 : vector<8xf32> to vector<8x1xf32>
    %123 = vector.broadcast %122 : vector<8x1xf32> to vector<8x128xf32>
    %124 = arith.subf %120, %123 : vector<8x128xf32>
    %125 = math.exp %124 : vector<8x128xf32>
    %cst_40 = arith.constant dense<0.000000e+00> : vector<8xf32>
    %126 = vector.multi_reduction <add>, %125, %cst_40 [1] : vector<8x128xf32> to vector<8xf32>
    %127 = vector.shape_cast %126 : vector<8xf32> to vector<8x1xf32>
    %128 = vector.broadcast %127 : vector<8x1xf32> to vector<8x128xf32>
    %129 = arith.divf %125, %128 : vector<8x128xf32>
    %130 = vector.broadcast %13 : vector<1x128xf32> to vector<8x128xf32>
    %131 = arith.mulf %115, %130 : vector<8x128xf32>
    %cst_41 = arith.constant dense<0.000000e+00> : vector<8xf32>
    %132 = vector.multi_reduction <add>, %131, %cst_41 [1] : vector<8x128xf32> to vector<8xf32>
    %133 = vector.shape_cast %132 : vector<8xf32> to vector<8x1xf32>
    %134 = vector.broadcast %14 : vector<1x1xf32> to vector<8x1xf32>
    %135 = arith.addf %133, %134 : vector<8x1xf32>
    %cst_42 = arith.constant 0.000000e+00 : f32
    %136 = vector.broadcast %cst_42 : f32 to vector<1x128xf32>
    %137 = arith.cmpf ogt, %15, %136 : vector<1x128xf32>
    %138 = vector.shape_cast %137 : vector<1x128xi1> to vector<1x128xi1>
    %139 = vector.broadcast %138 : vector<1x128xi1> to vector<8x128xi1>
    %140 = vector.shape_cast %135 : vector<8x1xf32> to vector<8x1xf32>
    %141 = vector.broadcast %140 : vector<8x1xf32> to vector<8x128xf32>
    %142 = arith.select %139, %141, %129 : vector<8x128xi1>, vector<8x128xf32>
    %c0_43 = arith.constant 0 : index
    %c0_44 = arith.constant 0 : index
    %143 = vector.load %arg8[%c0_43, %c0_44] : memref<8x128xf32, #tpu.memory_space<vmem>>, vector<8x128xf32>
    tpu.vector_store %arg8[%c0_43, %c0_44], %142 {strides = array<i32>} : memref<8x128xf32, #tpu.memory_space<vmem>>, vector<8x128xf32>,
    return
  }
  func.func @transform_0(%arg0: i32) -> (i32, i32) {
    %c0_i32 = arith.constant 0 : i32
    %c0_i32_0 = arith.constant 0 : i32
    return %arg0, %c0_i32 : i32, i32
  }
  func.func @transform_1(%arg0: i32) -> (i32, i32) {
    %c0_i32 = arith.constant 0 : i32
    %c0_i32_0 = arith.constant 0 : i32
    %c0_i32_1 = arith.constant 0 : i32
    return %c0_i32, %c0_i32_0 : i32, i32
  }
  func.func @transform_2(%arg0: i32) -> (i32, i32) {
    %c0_i32 = arith.constant 0 : i32
    %c0_i32_0 = arith.constant 0 : i32
    %c0_i32_1 = arith.constant 0 : i32
    return %c0_i32, %c0_i32_0 : i32, i32
  }
  func.func @transform_3(%arg0: i32) -> (i32, i32) {
    %c0_i32 = arith.constant 0 : i32
    %c0_i32_0 = arith.constant 0 : i32
    %c0_i32_1 = arith.constant 0 : i32
    return %c0_i32, %c0_i32_0 : i32, i32
  }
  func.func @transform_4(%arg0: i32) -> (i32, i32) {
    %c0_i32 = arith.constant 0 : i32
    %c0_i32_0 = arith.constant 0 : i32
    %c0_i32_1 = arith.constant 0 : i32
    return %c0_i32, %c0_i32_0 : i32, i32
  }
  func.func @transform_5(%arg0: i32) -> (i32, i32) {
    %c0_i32 = arith.constant 0 : i32
    %c0_i32_0 = arith.constant 0 : i32
    %c0_i32_1 = arith.constant 0 : i32
    return %c0_i32, %c0_i32_0 : i32, i32
  }
  func.func @transform_6(%arg0: i32) -> (i32, i32) {
    %c0_i32 = arith.constant 0 : i32
    %c0_i32_0 = arith.constant 0 : i32
    %c0_i32_1 = arith.constant 0 : i32
    return %c0_i32, %c0_i32_0 : i32, i32
  }
  func.func @transform_7(%arg0: i32) -> (i32, i32) {
    %c0_i32 = arith.constant 0 : i32
    %c0_i32_0 = arith.constant 0 : i32
    return %arg0, %c0_i32 : i32, i32
  }
}

</mosaic_0001>

<llo_original>
// kernel: ppo_forward.1
$region0: #{ppo_forward.1}
  #allocation0 [shape = 'u32[]', space=smem, size = 0x4, offset = 0x4, fixed_abs, tag = 'smem constant byte address 0x4 - core index']
  #allocation1 [shape = 'u32[144,128]{1,0:T(1,128)}', space=vmem, size = 0x12000, scoped, tag = 'internal scratch']
  %s0 = inlined_call_operand.hbm [shape: f32[8,16], index: 0, kind: input, shape index: {}]
  %s1 = inlined_call_operand.vmem [shape: bf16[16,256], index: 1, kind: input, shape index: {}]
  %s2 = inlined_call_operand.hbm [shape: bf16[256,256], index: 2, kind: input, shape index: {}]
  %s3 = inlined_call_operand.hbm [shape: bf16[256,128], index: 3, kind: input, shape index: {}]
  %s4 = inlined_call_operand.hbm [shape: bf16[128,128], index: 4, kind: input, shape index: {}]
  %s5 = inlined_call_operand.hbm [shape: bf16[128,128], index: 5, kind: input, shape index: {}]
  %s6 = inlined_call_operand.hbm [shape: f32[16,256], index: 6, kind: input, shape index: {}]
  %s7 = inlined_call_operand.vmem [shape: f32[8,128], index: 7, kind: output, shape index: {}]
  %s8 = sld [smem:[#allocation0]]
  $region62: #{ppo_forward.1} parent=0
    _
  %s10 = ssub.s32 1, %s8
  %s11 = scalar_select 0, %s10, %s8
  $region1: #{ppo_forward.1} parent=0
    #allocation2 [shape = 'u8[4096]{0}', space=vmem, size = 0x1000, scoped, tag = 'input window, operand 0, single buffered']
    #allocation3 [shape = 's32[1]{0}', space=sflag, size = 0x4, scoped, tag = 'scoped memory for ppo_forward.1']
    #allocation4 [shape = 'u8[131072]{0}', space=vmem, size = 0x20000, scoped, tag = 'input window, operand 2, single buffered']
    #allocation5 [shape = 's32[1]{0}', space=sflag, size = 0x4, scoped, tag = 'scoped memory for ppo_forward.1']
    #allocation6 [shape = 'u8[65536]{0}', space=vmem, size = 0x10000, scoped, tag = 'input window, operand 3, single buffered']
    #allocation7 [shape = 'u8[32768]{0}', space=vmem, size = 0x8000, scoped, tag = 'input window, operand 4, single buffered']
    #allocation8 [shape = 's32[1]{0}', space=sflag, size = 0x4, scoped, tag = 'scoped memory for ppo_forward.1']
    #allocation9 [shape = 'u8[32768]{0}', space=vmem, size = 0x8000, scoped, tag = 'input window, operand 5, single buffered']
    #allocation10 [shape = 'u8[16384]{0}', space=vmem, size = 0x4000, scoped, tag = 'input window, operand 6, single buffered']
    #allocation11 [shape = 's32[1]{0}', space=sflag, size = 0x4, scoped, tag = 'scoped memory for ppo_forward.1']
    %12 = vsyncpa [#allocation3], 0
    %13 = vsyncpa [#allocation5], 0
    %14 = vsyncpa [#allocation8], 0
    %15 = vsyncpa [#allocation11], 0
    // Predicated region
    $region2: #{ppo_forward.1} parent=1 // pred_check
      _
    $region3: #{ppo_forward.1} parent=1 // pred_check_branch
      %17 = sbr.rel (0) target = $region5
    $region4: #{ppo_forward.1} parent=1 // pred_region
      %s19 = ssub.s32 128, 128
      %20 = vsyncadd [#allocation3], %s19
      %s22 = sshll.u32 [#allocation2], 4
      %s23 = int_to_ptr.vmem [resolvable:$true] %s22
      %25 = dma.hbm_to_vmem [thread:$0]  %s0, 128, %s23, [#allocation3]
    $region5: #{ppo_forward.1} parent=1 // pred_fallthru
      _
    // Predicated region
    $region6: #{ppo_forward.1} parent=1 // pred_check
      _
    $region7: #{ppo_forward.1} parent=1 // pred_check_branch
      %27 = sbr.rel (0) target = $region9
    $region8: #{ppo_forward.1} parent=1 // pred_region
      _
    $region9: #{ppo_forward.1} parent=1 // pred_fallthru
      _
    // Predicated region
    $region10: #{ppo_forward.1} parent=1 // pred_check
      _
    $region11: #{ppo_forward.1} parent=1 // pred_check_branch
      %29 = sbr.rel (0) target = $region13
    $region12: #{ppo_forward.1} parent=1 // pred_region
      %s31 = ssub.s32 4096, 4096
      %32 = vsyncadd [#allocation5], %s31
      %s33 = sshll.u32 [#allocation4], 4
      %s34 = int_to_ptr.vmem [resolvable:$true] %s33
      %39 = dma.hbm_to_vmem [thread:$0]  %s2, 4096, %s34, [#allocation5], 128, 128, 8
    $region13: #{ppo_forward.1} parent=1 // pred_fallthru
      _
    // Predicated region
    $region14: #{ppo_forward.1} parent=1 // pred_check
      _
    $region15: #{ppo_forward.1} parent=1 // pred_check_branch
      %41 = sbr.rel (0) target = $region17
    $region16: #{ppo_forward.1} parent=1 // pred_region
      %s43 = ssub.s32 2048, 2048
      %44 = vsyncadd [#allocation5], %s43
      %s45 = sshll.u32 [#allocation6], 4
      %s46 = int_to_ptr.vmem [resolvable:$true] %s45
      %51 = dma.hbm_to_vmem [thread:$0]  %s3, 2048, %s46, [#allocation5], 64, 64, 4
    $region17: #{ppo_forward.1} parent=1 // pred_fallthru
      _
    // Predicated region
    $region18: #{ppo_forward.1} parent=1 // pred_check
      _
    $region19: #{ppo_forward.1} parent=1 // pred_check_branch
      %53 = sbr.rel (0) target = $region21
    $region20: #{ppo_forward.1} parent=1 // pred_region
      %s55 = ssub.s32 1024, 1024
      %56 = vsyncadd [#allocation8], %s55
      %s57 = sshll.u32 [#allocation7], 4
      %s58 = int_to_ptr.vmem [resolvable:$true] %s57
      %63 = dma.hbm_to_vmem [thread:$0]  %s4, 1024, %s58, [#allocation8], 64, 64, 4
    $region21: #{ppo_forward.1} parent=1 // pred_fallthru
      _
    // Predicated region
    $region22: #{ppo_forward.1} parent=1 // pred_check
      _
    $region23: #{ppo_forward.1} parent=1 // pred_check_branch
      %65 = sbr.rel (0) target = $region25
    $region24: #{ppo_forward.1} parent=1 // pred_region
      %s67 = ssub.s32 1024, 1024
      %68 = vsyncadd [#allocation8], %s67
      %s69 = sshll.u32 [#allocation9], 4
      %s70 = int_to_ptr.vmem [resolvable:$true] %s69
      %75 = dma.hbm_to_vmem [thread:$0]  %s5, 1024, %s70, [#allocation8], 64, 64, 4
    $region25: #{ppo_forward.1} parent=1 // pred_fallthru
      _
    // Predicated region
    $region26: #{ppo_forward.1} parent=1 // pred_check
      _
    $region27: #{ppo_forward.1} parent=1 // pred_check_branch
      %77 = sbr.rel (0) target = $region29
    $region28: #{ppo_forward.1} parent=1 // pred_region
      %s79 = ssub.s32 512, 512
      %80 = vsyncadd [#allocation11], %s79
      %s81 = sshll.u32 [#allocation10], 4
      %s82 = int_to_ptr.vmem [resolvable:$true] %s81
      %87 = dma.hbm_to_vmem [thread:$0]  %s6, 512, %s82, [#allocation11], 256, 256, 16
    $region29: #{ppo_forward.1} parent=1 // pred_fallthru
      _
    // Predicated region
    $region30: #{ppo_forward.1} parent=1 // pred_check
      _
    $region31: #{ppo_forward.1} parent=1 // pred_check_branch
      %89 = sbr.rel (0) target = $region33
    $region32: #{ppo_forward.1} parent=1 // pred_region
      %90 = dma.done [#allocation3], 128
    $region33: #{ppo_forward.1} parent=1 // pred_fallthru
      _
    // Predicated region
    $region34: #{ppo_forward.1} parent=1 // pred_check
      _
    $region35: #{ppo_forward.1} parent=1 // pred_check_branch
      %92 = sbr.rel (0) target = $region37
    $region36: #{ppo_forward.1} parent=1 // pred_region
      %93 = dma.done [#allocation5], 4096
    $region37: #{ppo_forward.1} parent=1 // pred_fallthru
      _
    // Predicated region
    $region38: #{ppo_forward.1} parent=1 // pred_check
      _
    $region39: #{ppo_forward.1} parent=1 // pred_check_branch
      %95 = sbr.rel (0) target = $region41
    $region40: #{ppo_forward.1} parent=1 // pred_region
      %96 = dma.done [#allocation5], 2048
    $region41: #{ppo_forward.1} parent=1 // pred_fallthru
      _
    // Predicated region
    $region42: #{ppo_forward.1} parent=1 // pred_check
      _
    $region43: #{ppo_forward.1} parent=1 // pred_check_branch
      %98 = sbr.rel (0) target = $region45
    $region44: #{ppo_forward.1} parent=1 // pred_region
      %99 = dma.done [#allocation8], 1024
    $region45: #{ppo_forward.1} parent=1 // pred_fallthru
      _
    // Predicated region
    $region46: #{ppo_forward.1} parent=1 // pred_check
      _
    $region47: #{ppo_forward.1} parent=1 // pred_check_branch
      %101 = sbr.rel (0) target = $region49
    $region48: #{ppo_forward.1} parent=1 // pred_region
      %102 = dma.done [#allocation8], 1024
    $region49: #{ppo_forward.1} parent=1 // pred_fallthru
      _
    // Predicated region
    $region50: #{ppo_forward.1} parent=1 // pred_check
      _
    $region51: #{ppo_forward.1} parent=1 // pred_check_branch
      %104 = sbr.rel (0) target = $region53
    $region52: #{ppo_forward.1} parent=1 // pred_region
      %105 = dma.done [#allocation11], 512
    $region53: #{ppo_forward.1} parent=1 // pred_fallthru
      _
    %v107 = vld [vmem:[#allocation2] sm:$0xff]
    %v108 = vld [vmem:[#allocation10] sm:$0xff]
    %v109 = vld [vmem:[#allocation10 + $0x8] sm:$0xff]
    %v110 = vld [vmem:[#allocation10 + $0x10] sm:$0xff]
    %v111 = vpack.c.bf16 %v107, %v107
    %v112 = vld [vmem:[%s1] sm:$0xff]
    %v113 = vld [vmem:[%s1 + $0x8] sm:$0xff]
    %v114 = vlaneseq
    %v115 = vshrl.u32 %v114, 7
    %v116 = vsub.s32 0, %v115
    %v117 = vrot.slane %v108, %v116
    %v118 = vlaneseq
    %v119 = vshrl.u32 %v118, 7
    %v120 = vsub.s32 0, %v119
    %v121 = vrot.slane %v109, %v120
    %v124 = vunpack.c.l.b16 %v112
    %v125 = vunpack.c.h.b16 %v112
    %v126 = vunpack.c.l.b16 %v113
    %v127 = vunpack.c.h.b16 %v113
    %v128 = vpack.c.b16 %v126, %v124
    %v129 = vpack.c.b16 %v127, %v125
    %vm132 = vcmask 130048
    %v134 = vsel %vm132, %v111, 0
    %136 = vmatprep.subr.bf16.mxu0 %v129
    %137 = vmatpush1.bf16.msra.mxu0 %v128
    %138 = vmatprep.subr.bf16.mxu0 0
    %139 = vmatpush1.bf16.msra.mxu0 0
    %140 = vmatprep.subr.bf16.mxu0 0
    %141 = vmatpush1.bf16.msra.mxu0 0
    %142 = vmatprep.subr.bf16.mxu0 0
    %143 = vmatpush1.bf16.msra.mxu0 0
    %144 = vmatprep.subr.bf16.mxu0 0
    %145 = vmatpush1.bf16.msra.mxu0 0
    %146 = vmatprep.subr.bf16.mxu0 0
    %147 = vmatpush1.bf16.msra.mxu0 0
    %148 = vmatprep.subr.bf16.mxu0 0
    %149 = vmatpush1.bf16.msra.mxu0 0
    %150 = vmatprep.subr.bf16.mxu0 0
    %151 = vmatpush1.bf16.msra.mxu0 0
    %152 = vmatprep.subr.bf16.mxu0 0
    %153 = vmatpush1.bf16.msra.mxu0 0
    %154 = vmatprep.subr.bf16.mxu0 0
    %155 = vmatpush1.bf16.msra.mxu0 0
    %156 = vmatprep.subr.bf16.mxu0 0
    %157 = vmatpush1.bf16.msra.mxu0 0
    %158 = vmatprep.subr.bf16.mxu0 0
    %159 = vmatpush1.bf16.msra.mxu0 0
    %160 = vmatprep.subr.bf16.mxu0 0
    %161 = vmatpush1.bf16.msra.mxu0 0
    %162 = vmatprep.subr.bf16.mxu0 0
    %163 = vmatpush1.bf16.msra.mxu0 0
    %164 = vmatprep.subr.bf16.mxu0 0
    %165 = vmatpush1.bf16.msra.mxu0 0
    %166 = vmatprep.subr.bf16.mxu0 0
    %167 = vmatpush1.bf16.msra.mxu0 0
    %168 = vmatprep.mubr.bf16.mxu0 0
    %169 = vmatmul.mubr.bf16.gmra.mrb[0].mxu0 %v134
    %v170 = vpop.f32.mrb[0].mxu0
    %v171 = vadd.f32 %v117, %v170
    %v172 = vpop.f32.mrb[0].mxu0
    %v173 = vadd.f32 %v121, %v172
    %v174 = vpop.f32.mrb[0].mxu0
    %v175 = vpop.f32.mrb[0].mxu0
    %176 = vdwg.mxu0
    %v177 = vadd.f32 %v171, %v173
    %178 = vadd.xlane.f32.xlu0 %v177
    %v179 = vpop.xlane.xlu0 %178
    %v180 = vrcp.pop 256.0
    %v181 = vmul.f32 %v179, %v180
    %v182 = vmul.f32 %v171, %v171
    %v183 = vmul.f32 %v173, %v173
    %v184 = vadd.f32 %v182, %v183
    %185 = vadd.xlane.f32.xlu0 %v184
    %v186 = vpop.xlane.xlu0 %185
    %v187 = vmul.f32 %v186, %v180
    %v188 = vmul.f32 %v181, %v181
    %v189 = vsub.f32 %v187, %v188
    %v190 = vmax.f32 %v189, 0.0
    %v191 = vsub.f32 %v171, %v181
    %v192 = vsub.f32 %v173, %v181
    %v193 = vadd.f32 %v190, 1e-05
    %v194 = vrsqrt.pop %v193
    %v195 = vmul.f32 %v191, %v194
    %v196 = vmul.f32 %v192, %v194
    %v197 = vlaneseq
    %v198 = vshrl.u32 %v197, 7
    %v199 = vsub.s32 1, %v198
    %v200 = vrot.slane %v108, %v199
    %v201 = vlaneseq
    %v202 = vshrl.u32 %v201, 7
    %v203 = vsub.s32 1, %v202
    %v204 = vrot.slane %v109, %v203
    %v205 = vmul.f32 %v195, %v200
    %v206 = vmul.f32 %v196, %v204
    %v207 = vlaneseq
    %v208 = vshrl.u32 %v207, 7
    %v209 = vsub.s32 2, %v208
    %v210 = vrot.slane %v108, %v209
    %v211 = vlaneseq
    %v212 = vshrl.u32 %v211, 7
    %v213 = vsub.s32 2, %v212
    %v214 = vrot.slane %v109, %v213
    %v215 = vadd.f32 %v205, %v210
    %v216 = vadd.f32 %v206, %v214
    %v217 = vmax.f32 %v215, 0.0
    %v218 = vmax.f32 %v216, 0.0
    %v219 = vpack.c.bf16 %v217, %v217
    %v220 = vpack.c.bf16 %v218, %v218
    %v221 = vld [vmem:[#allocation4] sm:$0xff]
    %v222 = vld [vmem:[#allocation4 + $0x8] sm:$0xff]
    %v223 = vld [vmem:[#allocation4 + $0x10] sm:$0xff]
    %v224 = vld [vmem:[#allocation4 + $0x18] sm:$0xff]
    %v225 = vld [vmem:[#allocation4 + $0x20] sm:$0xff]
    %v226 = vld [vmem:[#allocation4 + $0x28] sm:$0xff]
    %v227 = vld [vmem:[#allocation4 + $0x30] sm:$0xff]
    %v228 = vld [vmem:[#allocation4 + $0x38] sm:$0xff]
    %v229 = vld [vmem:[#allocation4 + $0x40] sm:$0xff]
    %v230 = vld [vmem:[#allocation4 + $0x48] sm:$0xff]
    %v231 = vld [vmem:[#allocation4 + $0x50] sm:$0xff]
    %v232 = vld [vmem:[#allocation4 + $0x58] sm:$0xff]
    %v233 = vld [vmem:[#allocation4 + $0x60] sm:$0xff]
    %v234 = vld [vmem:[#allocation4 + $0x68] sm:$0xff]
    %v235 = vld [vmem:[#allocation4 + $0x70] sm:$0xff]
    %v236 = vld [vmem:[#allocation4 + $0x78] sm:$0xff]
    %v237 = vld [vmem:[#allocation4 + $0x80] sm:$0xff]
    %v238 = vld [vmem:[#allocation4 + $0x88] sm:$0xff]
    %v239 = vld [vmem:[#allocation4 + $0x90] sm:$0xff]
    %v240 = vld [vmem:[#allocation4 + $0x98] sm:$0xff]
    %v241 = vld [vmem:[#allocation4 + $0xa0] sm:$0xff]
    %v242 = vld [vmem:[#allocation4 + $0xa8] sm:$0xff]
    %v243 = vld [vmem:[#allocation4 + $0xb0] sm:$0xff]
    %v244 = vld [vmem:[#allocation4 + $0xb8] sm:$0xff]
    %v245 = vld [vmem:[#allocation4 + $0xc0] sm:$0xff]
    %v246 = vld [vmem:[#allocation4 + $0xc8] sm:$0xff]
    %v247 = vld [vmem:[#allocation4 + $0xd0] sm:$0xff]
    %v248 = vld [vmem:[#allocation4 + $0xd8] sm:$0xff]
    %v249 = vld [vmem:[#allocation4 + $0xe0] sm:$0xff]
    %v250 = vld [vmem:[#allocation4 + $0xe8] sm:$0xff]
    %v251 = vld [vmem:[#allocation4 + $0xf0] sm:$0xff]
    %v252 = vld [vmem:[#allocation4 + $0xf8] sm:$0xff]
    %v253 = vlaneseq
    %v254 = vshrl.u32 %v253, 7
    %v255 = vsub.s32 3, %v254
    %v256 = vrot.slane %v108, %v255
    %v257 = vlaneseq
    %v258 = vshrl.u32 %v257, 7
    %v259 = vsub.s32 3, %v258
    %v260 = vrot.slane %v109, %v259
    %v293 = vunpack.c.l.b16 %v221
    %v294 = vunpack.c.h.b16 %v221
    %v295 = vunpack.c.l.b16 %v222
    %v296 = vunpack.c.h.b16 %v222
    %v297 = vunpack.c.l.b16 %v223
    %v298 = vunpack.c.h.b16 %v223
    %v299 = vunpack.c.l.b16 %v224
    %v300 = vunpack.c.h.b16 %v224
    %v301 = vunpack.c.l.b16 %v225
    %v302 = vunpack.c.h.b16 %v225
    %v303 = vunpack.c.l.b16 %v226
    %v304 = vunpack.c.h.b16 %v226
    %v305 = vunpack.c.l.b16 %v227
    %v306 = vunpack.c.h.b16 %v227
    %v307 = vunpack.c.l.b16 %v228
    %v308 = vunpack.c.h.b16 %v228
    %v309 = vunpack.c.l.b16 %v229
    %v310 = vunpack.c.h.b16 %v229
    %v311 = vunpack.c.l.b16 %v230
    %v312 = vunpack.c.h.b16 %v230
    %v313 = vunpack.c.l.b16 %v231
    %v314 = vunpack.c.h.b16 %v231
    %v315 = vunpack.c.l.b16 %v232
    %v316 = vunpack.c.h.b16 %v232
    %v317 = vunpack.c.l.b16 %v233
    %v318 = vunpack.c.h.b16 %v233
    %v319 = vunpack.c.l.b16 %v234
    %v320 = vunpack.c.h.b16 %v234
    %v321 = vunpack.c.l.b16 %v235
    %v322 = vunpack.c.h.b16 %v235
    %v323 = vunpack.c.l.b16 %v236
    %v324 = vunpack.c.h.b16 %v236
    %v325 = vunpack.c.l.b16 %v237
    %v326 = vunpack.c.h.b16 %v237
    %v327 = vunpack.c.l.b16 %v238
    %v328 = vunpack.c.h.b16 %v238
    %v329 = vunpack.c.l.b16 %v239
    %v330 = vunpack.c.h.b16 %v239
    %v331 = vunpack.c.l.b16 %v240
    %v332 = vunpack.c.h.b16 %v240
    %v333 = vunpack.c.l.b16 %v241
    %v334 = vunpack.c.h.b16 %v241
    %v335 = vunpack.c.l.b16 %v242
    %v336 = vunpack.c.h.b16 %v242
    %v337 = vunpack.c.l.b16 %v243
    %v338 = vunpack.c.h.b16 %v243
    %v339 = vunpack.c.l.b16 %v244
    %v340 = vunpack.c.h.b16 %v244
    %v341 = vunpack.c.l.b16 %v245
    %v342 = vunpack.c.h.b16 %v245
    %v343 = vunpack.c.l.b16 %v246
    %v344 = vunpack.c.h.b16 %v246
    %v345 = vunpack.c.l.b16 %v247
    %v346 = vunpack.c.h.b16 %v247
    %v347 = vunpack.c.l.b16 %v248
    %v348 = vunpack.c.h.b16 %v248
    %v349 = vunpack.c.l.b16 %v249
    %v350 = vunpack.c.h.b16 %v249
    %v351 = vunpack.c.l.b16 %v250
    %v352 = vunpack.c.h.b16 %v250
    %v353 = vunpack.c.l.b16 %v251
    %v354 = vunpack.c.h.b16 %v251
    %v355 = vunpack.c.l.b16 %v252
    %v356 = vunpack.c.h.b16 %v252
    %v357 = vpack.c.b16 %v295, %v293
    %v358 = vpack.c.b16 %v296, %v294
    %v359 = vpack.c.b16 %v299, %v297
    %v360 = vpack.c.b16 %v300, %v298
    %v361 = vpack.c.b16 %v303, %v301
    %v362 = vpack.c.b16 %v304, %v302
    %v363 = vpack.c.b16 %v307, %v305
    %v364 = vpack.c.b16 %v308, %v306
    %v365 = vpack.c.b16 %v311, %v309
    %v366 = vpack.c.b16 %v312, %v310
    %v367 = vpack.c.b16 %v315, %v313
    %v368 = vpack.c.b16 %v316, %v314
    %v369 = vpack.c.b16 %v319, %v317
    %v370 = vpack.c.b16 %v320, %v318
    %v371 = vpack.c.b16 %v323, %v321
    %v372 = vpack.c.b16 %v324, %v322
    %v373 = vpack.c.b16 %v327, %v325
    %v374 = vpack.c.b16 %v328, %v326
    %v375 = vpack.c.b16 %v331, %v329
    %v376 = vpack.c.b16 %v332, %v330
    %v377 = vpack.c.b16 %v335, %v333
    %v378 = vpack.c.b16 %v336, %v334
    %v379 = vpack.c.b16 %v339, %v337
    %v380 = vpack.c.b16 %v340, %v338
    %v381 = vpack.c.b16 %v343, %v341
    %v382 = vpack.c.b16 %v344, %v342
    %v383 = vpack.c.b16 %v347, %v345
    %v384 = vpack.c.b16 %v348, %v346
    %v385 = vpack.c.b16 %v351, %v349
    %v386 = vpack.c.b16 %v352, %v350
    %v387 = vpack.c.b16 %v355, %v353
    %v388 = vpack.c.b16 %v356, %v354
    %421 = vmatprep.subr.bf16.mxu0 %v358
    %422 = vmatpush1.bf16.msra.mxu0 %v357
    %423 = vmatprep.subr.bf16.mxu0 %v360
    %424 = vmatpush1.bf16.msra.mxu0 %v359
    %425 = vmatprep.subr.bf16.mxu0 %v362
    %426 = vmatpush1.bf16.msra.mxu0 %v361
    %427 = vmatprep.subr.bf16.mxu0 %v364
    %428 = vmatpush1.bf16.msra.mxu0 %v363
    %429 = vmatprep.subr.bf16.mxu0 %v366
    %430 = vmatpush1.bf16.msra.mxu0 %v365
    %431 = vmatprep.subr.bf16.mxu0 %v368
    %432 = vmatpush1.bf16.msra.mxu0 %v367
    %433 = vmatprep.subr.bf16.mxu0 %v370
    %434 = vmatpush1.bf16.msra.mxu0 %v369
    %435 = vmatprep.subr.bf16.mxu0 %v372
    %436 = vmatpush1.bf16.msra.mxu0 %v371
    %437 = vmatprep.subr.bf16.mxu0 %v374
    %438 = vmatpush1.bf16.msra.mxu0 %v373
    %439 = vmatprep.subr.bf16.mxu0 %v376
    %440 = vmatpush1.bf16.msra.mxu0 %v375
    %441 = vmatprep.subr.bf16.mxu0 %v378
    %442 = vmatpush1.bf16.msra.mxu0 %v377
    %443 = vmatprep.subr.bf16.mxu0 %v380
    %444 = vmatpush1.bf16.msra.mxu0 %v379
    %445 = vmatprep.subr.bf16.mxu0 %v382
    %446 = vmatpush1.bf16.msra.mxu0 %v381
    %447 = vmatprep.subr.bf16.mxu0 %v384
    %448 = vmatpush1.bf16.msra.mxu0 %v383
    %449 = vmatprep.subr.bf16.mxu0 %v386
    %450 = vmatpush1.bf16.msra.mxu0 %v385
    %451 = vmatprep.subr.bf16.mxu0 %v388
    %452 = vmatpush1.bf16.msra.mxu0 %v387
    %453 = vmatprep.mubr.bf16.mxu0 %v220
    %454 = vmatmul.mubr.bf16.gmra.mrb[0].mxu0 %v219
    %v455 = vpop.f32.mrb[0].mxu0
    %v456 = vadd.f32 %v256, %v455
    %v457 = vpop.f32.mrb[0].mxu0
    %v458 = vadd.f32 %v260, %v457
    %v459 = vpop.f32.mrb[0].mxu0
    %v460 = vpop.f32.mrb[0].mxu0
    %461 = vdwg.mxu0
    %v462 = vadd.f32 %v456, %v458
    %463 = vadd.xlane.f32.xlu0 %v462
    %v464 = vpop.xlane.xlu0 %463
    %v465 = vmul.f32 %v464, %v180
    %v466 = vmul.f32 %v456, %v456
    %v467 = vmul.f32 %v458, %v458
    %v468 = vadd.f32 %v466, %v467
    %469 = vadd.xlane.f32.xlu0 %v468
    %v470 = vpop.xlane.xlu0 %469
    %v471 = vmul.f32 %v470, %v180
    %v472 = vmul.f32 %v465, %v465
    %v473 = vsub.f32 %v471, %v472
    %v474 = vmax.f32 %v473, 0.0
    %v475 = vsub.f32 %v456, %v465
    %v476 = vsub.f32 %v458, %v465
    %v477 = vadd.f32 %v474, 1e-05
    %v478 = vrsqrt.pop %v477
    %v479 = vmul.f32 %v475, %v478
    %v480 = vmul.f32 %v476, %v478
    %v481 = vlaneseq
    %v482 = vshrl.u32 %v481, 7
    %v483 = vsub.s32 4, %v482
    %v484 = vrot.slane %v108, %v483
    %v485 = vlaneseq
    %v486 = vshrl.u32 %v485, 7
    %v487 = vsub.s32 4, %v486
    %v488 = vrot.slane %v109, %v487
    %v489 = vmul.f32 %v479, %v484
    %v490 = vmul.f32 %v480, %v488
    %v491 = vlaneseq
    %v492 = vshrl.u32 %v491, 7
    %v493 = vsub.s32 5, %v492
    %v494 = vrot.slane %v108, %v493
    %v495 = vlaneseq
    %v496 = vshrl.u32 %v495, 7
    %v497 = vsub.s32 5, %v496
    %v498 = vrot.slane %v109, %v497
    %v499 = vadd.f32 %v489, %v494
    %v500 = vadd.f32 %v490, %v498
    %v501 = vmax.f32 %v499, 0.0
    %v502 = vmax.f32 %v500, 0.0
    %v503 = vpack.c.bf16 %v501, %v501
    %v504 = vpack.c.bf16 %v502, %v502
    %v505 = vld [vmem:[#allocation6] sm:$0xf]
    %v506 = vld [vmem:[#allocation6 + $0x4] sm:$0xf]
    %v507 = vld [vmem:[#allocation6 + $0x8] sm:$0xf]
    %v508 = vld [vmem:[#allocation6 + $0xc] sm:$0xf]
    %v509 = vld [vmem:[#allocation6 + $0x10] sm:$0xf]
    %v510 = vld [vmem:[#allocation6 + $0x14] sm:$0xf]
    %v511 = vld [vmem:[#allocation6 + $0x18] sm:$0xf]
    %v512 = vld [vmem:[#allocation6 + $0x1c] sm:$0xf]
    %v513 = vld [vmem:[#allocation6 + $0x20] sm:$0xf]
    %v514 = vld [vmem:[#allocation6 + $0x24] sm:$0xf]
    %v515 = vld [vmem:[#allocation6 + $0x28] sm:$0xf]
    %v516 = vld [vmem:[#allocation6 + $0x2c] sm:$0xf]
    %v517 = vld [vmem:[#allocation6 + $0x30] sm:$0xf]
    %v518 = vld [vmem:[#allocation6 + $0x34] sm:$0xf]
    %v519 = vld [vmem:[#allocation6 + $0x38] sm:$0xf]
    %v520 = vld [vmem:[#allocation6 + $0x3c] sm:$0xf]
    %v521 = vld [vmem:[#allocation6 + $0x40] sm:$0xf]
    %v522 = vld [vmem:[#allocation6 + $0x44] sm:$0xf]
    %v523 = vld [vmem:[#allocation6 + $0x48] sm:$0xf]
    %v524 = vld [vmem:[#allocation6 + $0x4c] sm:$0xf]
    %v525 = vld [vmem:[#allocation6 + $0x50] sm:$0xf]
    %v526 = vld [vmem:[#allocation6 + $0x54] sm:$0xf]
    %v527 = vld [vmem:[#allocation6 + $0x58] sm:$0xf]
    %v528 = vld [vmem:[#allocation6 + $0x5c] sm:$0xf]
    %v529 = vld [vmem:[#allocation6 + $0x60] sm:$0xf]
    %v530 = vld [vmem:[#allocation6 + $0x64] sm:$0xf]
    %v531 = vld [vmem:[#allocation6 + $0x68] sm:$0xf]
    %v532 = vld [vmem:[#allocation6 + $0x6c] sm:$0xf]
    %v533 = vld [vmem:[#allocation6 + $0x70] sm:$0xf]
    %v534 = vld [vmem:[#allocation6 + $0x74] sm:$0xf]
    %v535 = vld [vmem:[#allocation6 + $0x78] sm:$0xf]
    %v536 = vld [vmem:[#allocation6 + $0x7c] sm:$0xf]
    %v537 = vlaneseq
    %v538 = vshrl.u32 %v537, 7
    %v539 = vsub.s32 6, %v538
    %v540 = vrot.slane %v108, %v539
    %v573 = vunpack.c.l.b16 %v505
    %v574 = vunpack.c.l.b16 %v506
    %v575 = vunpack.c.l.b16 %v507
    %v576 = vunpack.c.l.b16 %v508
    %v577 = vunpack.c.l.b16 %v509
    %v578 = vunpack.c.l.b16 %v510
    %v579 = vunpack.c.l.b16 %v511
    %v580 = vunpack.c.l.b16 %v512
    %v581 = vunpack.c.l.b16 %v513
    %v582 = vunpack.c.l.b16 %v514
    %v583 = vunpack.c.l.b16 %v515
    %v584 = vunpack.c.l.b16 %v516
    %v585 = vunpack.c.l.b16 %v517
    %v586 = vunpack.c.l.b16 %v518
    %v587 = vunpack.c.l.b16 %v519
    %v588 = vunpack.c.l.b16 %v520
    %v589 = vunpack.c.l.b16 %v521
    %v590 = vunpack.c.l.b16 %v522
    %v591 = vunpack.c.l.b16 %v523
    %v592 = vunpack.c.l.b16 %v524
    %v593 = vunpack.c.l.b16 %v525
    %v594 = vunpack.c.l.b16 %v526
    %v595 = vunpack.c.l.b16 %v527
    %v596 = vunpack.c.l.b16 %v528
    %v597 = vunpack.c.l.b16 %v529
    %v598 = vunpack.c.l.b16 %v530
    %v599 = vunpack.c.l.b16 %v531
    %v600 = vunpack.c.l.b16 %v532
    %v601 = vunpack.c.l.b16 %v533
    %v602 = vunpack.c.l.b16 %v534
    %v603 = vunpack.c.l.b16 %v535
    %v604 = vunpack.c.l.b16 %v536
    %v605 = vpack.c.b16 %v574, %v573
    %v606 = vpack.c.b16 %v576, %v575
    %v607 = vpack.c.b16 %v578, %v577
    %v608 = vpack.c.b16 %v580, %v579
    %v609 = vpack.c.b16 %v582, %v581
    %v610 = vpack.c.b16 %v584, %v583
    %v611 = vpack.c.b16 %v586, %v585
    %v612 = vpack.c.b16 %v588, %v587
    %v613 = vpack.c.b16 %v590, %v589
    %v614 = vpack.c.b16 %v592, %v591
    %v615 = vpack.c.b16 %v594, %v593
    %v616 = vpack.c.b16 %v596, %v595
    %v617 = vpack.c.b16 %v598, %v597
    %v618 = vpack.c.b16 %v600, %v599
    %v619 = vpack.c.b16 %v602, %v601
    %v620 = vpack.c.b16 %v604, %v603
    %637 = vmatprep.subr.bf16.mxu0 0
    %638 = vmatpush1.bf16.msra.mxu0 %v605
    %639 = vmatprep.subr.bf16.mxu0 0
    %640 = vmatpush1.bf16.msra.mxu0 %v606
    %641 = vmatprep.subr.bf16.mxu0 0
    %642 = vmatpush1.bf16.msra.mxu0 %v607
    %643 = vmatprep.subr.bf16.mxu0 0
    %644 = vmatpush1.bf16.msra.mxu0 %v608
    %645 = vmatprep.subr.bf16.mxu0 0
    %646 = vmatpush1.bf16.msra.mxu0 %v609
    %647 = vmatprep.subr.bf16.mxu0 0
    %648 = vmatpush1.bf16.msra.mxu0 %v610
    %649 = vmatprep.subr.bf16.mxu0 0
    %650 = vmatpush1.bf16.msra.mxu0 %v611
    %651 = vmatprep.subr.bf16.mxu0 0
    %652 = vmatpush1.bf16.msra.mxu0 %v612
    %653 = vmatprep.subr.bf16.mxu0 0
    %654 = vmatpush1.bf16.msra.mxu0 %v613
    %655 = vmatprep.subr.bf16.mxu0 0
    %656 = vmatpush1.bf16.msra.mxu0 %v614
    %657 = vmatprep.subr.bf16.mxu0 0
    %658 = vmatpush1.bf16.msra.mxu0 %v615
    %659 = vmatprep.subr.bf16.mxu0 0
    %660 = vmatpush1.bf16.msra.mxu0 %v616
    %661 = vmatprep.subr.bf16.mxu0 0
    %662 = vmatpush1.bf16.msra.mxu0 %v617
    %663 = vmatprep.subr.bf16.mxu0 0
    %664 = vmatpush1.bf16.msra.mxu0 %v618
    %665 = vmatprep.subr.bf16.mxu0 0
    %666 = vmatpush1.bf16.msra.mxu0 %v619
    %667 = vmatprep.subr.bf16.mxu0 0
    %668 = vmatpush1.bf16.msra.mxu0 %v620
    %669 = vmatprep.mubr.bf16.mxu0 %v504
    %670 = vmatmul.mubr.bf16.gmra.mrb[0].mxu0 %v503
    %v671 = vpop.f32.mrb[0].mxu0
    %v672 = vadd.f32 %v540, %v671
    %v673 = vpop.f32.mrb[0].mxu0
    %v674 = vpop.f32.mrb[0].mxu0
    %v675 = vpop.f32.mrb[0].mxu0
    %676 = vdwg.mxu0
    %677 = vadd.xlane.f32.xlu0 %v672
    %v678 = vpop.xlane.xlu0 %677
    %v679 = vrcp.pop 128.0
    %v680 = vmul.f32 %v678, %v679
    %v681 = vmul.f32 %v672, %v672
    %682 = vadd.xlane.f32.xlu0 %v681
    %v683 = vpop.xlane.xlu0 %682
    %v684 = vmul.f32 %v683, %v679
    %v685 = vmul.f32 %v680, %v680
    %v686 = vsub.f32 %v684, %v685
    %v687 = vmax.f32 %v686, 0.0
    %v688 = vsub.f32 %v672, %v680
    %v689 = vadd.f32 %v687, 1e-05
    %v690 = vrsqrt.pop %v689
    %v691 = vmul.f32 %v688, %v690
    %v692 = vlaneseq
    %v693 = vshrl.u32 %v692, 7
    %v694 = vsub.s32 7, %v693
    %v695 = vrot.slane %v108, %v694
    %v696 = vmul.f32 %v691, %v695
    %v697 = vlaneseq
    %v698 = vshrl.u32 %v697, 7
    %v699 = vsub.s32 0, %v698
    %v700 = vrot.slane %v110, %v699
    %v701 = vadd.f32 %v696, %v700
    %v702 = vmax.f32 %v701, 0.0
    %v703 = vpack.c.bf16 %v702, %v702
    %v704 = vld [vmem:[#allocation7] sm:$0xf]
    %v705 = vld [vmem:[#allocation7 + $0x4] sm:$0xf]
    %v706 = vld [vmem:[#allocation7 + $0x8] sm:$0xf]
    %v707 = vld [vmem:[#allocation7 + $0xc] sm:$0xf]
    %v708 = vld [vmem:[#allocation7 + $0x10] sm:$0xf]
    %v709 = vld [vmem:[#allocation7 + $0x14] sm:$0xf]
    %v710 = vld [vmem:[#allocation7 + $0x18] sm:$0xf]
    %v711 = vld [vmem:[#allocation7 + $0x1c] sm:$0xf]
    %v712 = vld [vmem:[#allocation7 + $0x20] sm:$0xf]
    %v713 = vld [vmem:[#allocation7 + $0x24] sm:$0xf]
    %v714 = vld [vmem:[#allocation7 + $0x28] sm:$0xf]
    %v715 = vld [vmem:[#allocation7 + $0x2c] sm:$0xf]
    %v716 = vld [vmem:[#allocation7 + $0x30] sm:$0xf]
    %v717 = vld [vmem:[#allocation7 + $0x34] sm:$0xf]
    %v718 = vld [vmem:[#allocation7 + $0x38] sm:$0xf]
    %v719 = vld [vmem:[#allocation7 + $0x3c] sm:$0xf]
    %v720 = vlaneseq
    %v721 = vshrl.u32 %v720, 7
    %v722 = vsub.s32 1, %v721
    %v723 = vrot.slane %v110, %v722
    %v740 = vunpack.c.l.b16 %v704
    %v741 = vunpack.c.l.b16 %v705
    %v742 = vunpack.c.l.b16 %v706
    %v743 = vunpack.c.l.b16 %v707
    %v744 = vunpack.c.l.b16 %v708
    %v745 = vunpack.c.l.b16 %v709
    %v746 = vunpack.c.l.b16 %v710
    %v747 = vunpack.c.l.b16 %v711
    %v748 = vunpack.c.l.b16 %v712
    %v749 = vunpack.c.l.b16 %v713
    %v750 = vunpack.c.l.b16 %v714
    %v751 = vunpack.c.l.b16 %v715
    %v752 = vunpack.c.l.b16 %v716
    %v753 = vunpack.c.l.b16 %v717
    %v754 = vunpack.c.l.b16 %v718
    %v755 = vunpack.c.l.b16 %v719
    %v756 = vpack.c.b16 %v741, %v740
    %v757 = vpack.c.b16 %v743, %v742
    %v758 = vpack.c.b16 %v745, %v744
    %v759 = vpack.c.b16 %v747, %v746
    %v760 = vpack.c.b16 %v749, %v748
    %v761 = vpack.c.b16 %v751, %v750
    %v762 = vpack.c.b16 %v753, %v752
    %v763 = vpack.c.b16 %v755, %v754
    %772 = vmatprep.subr.bf16.mxu0 0
    %773 = vmatpush1.bf16.msra.mxu0 %v756
    %774 = vmatprep.subr.bf16.mxu0 0
    %775 = vmatpush1.bf16.msra.mxu0 %v757
    %776 = vmatprep.subr.bf16.mxu0 0
    %777 = vmatpush1.bf16.msra.mxu0 %v758
    %778 = vmatprep.subr.bf16.mxu0 0
    %779 = vmatpush1.bf16.msra.mxu0 %v759
    %780 = vmatprep.subr.bf16.mxu0 0
    %781 = vmatpush1.bf16.msra.mxu0 %v760
    %782 = vmatprep.subr.bf16.mxu0 0
    %783 = vmatpush1.bf16.msra.mxu0 %v761
    %784 = vmatprep.subr.bf16.mxu0 0
    %785 = vmatpush1.bf16.msra.mxu0 %v762
    %786 = vmatprep.subr.bf16.mxu0 0
    %787 = vmatpush1.bf16.msra.mxu0 %v763
    %788 = vmatprep.subr.bf16.mxu0 0
    %789 = vmatpush1.bf16.msra.mxu0 0
    %790 = vmatprep.subr.bf16.mxu0 0
    %791 = vmatpush1.bf16.msra.mxu0 0
    %792 = vmatprep.subr.bf16.mxu0 0
    %793 = vmatpush1.bf16.msra.mxu0 0
    %794 = vmatprep.subr.bf16.mxu0 0
    %795 = vmatpush1.bf16.msra.mxu0 0
    %796 = vmatprep.subr.bf16.mxu0 0
    %797 = vmatpush1.bf16.msra.mxu0 0
    %798 = vmatprep.subr.bf16.mxu0 0
    %799 = vmatpush1.bf16.msra.mxu0 0
    %800 = vmatprep.subr.bf16.mxu0 0
    %801 = vmatpush1.bf16.msra.mxu0 0
    %802 = vmatprep.subr.bf16.mxu0 0
    %803 = vmatpush1.bf16.msra.mxu0 0
    %804 = vmatprep.mubr.bf16.mxu0 0
    %805 = vmatmul.mubr.bf16.gmra.mrb[0].mxu0 %v703
    %v806 = vpop.f32.mrb[0].mxu0
    %v807 = vadd.f32 %v723, %v806
    %v808 = vpop.f32.mrb[0].mxu0
    %v809 = vpop.f32.mrb[0].mxu0
    %v810 = vpop.f32.mrb[0].mxu0
    %811 = vdwg.mxu0
    %v812 = vmax.f32 %v807, 0.0
    %v813 = vpack.c.bf16 %v812, %v812
    %v814 = vld [vmem:[#allocation9] sm:$0xf]
    %v815 = vld [vmem:[#allocation9 + $0x4] sm:$0xf]
    %v816 = vld [vmem:[#allocation9 + $0x8] sm:$0xf]
    %v817 = vld [vmem:[#allocation9 + $0xc] sm:$0xf]
    %v818 = vld [vmem:[#allocation9 + $0x10] sm:$0xf]
    %v819 = vld [vmem:[#allocation9 + $0x14] sm:$0xf]
    %v820 = vld [vmem:[#allocation9 + $0x18] sm:$0xf]
    %v821 = vld [vmem:[#allocation9 + $0x1c] sm:$0xf]
    %v822 = vld [vmem:[#allocation9 + $0x20] sm:$0xf]
    %v823 = vld [vmem:[#allocation9 + $0x24] sm:$0xf]
    %v824 = vld [vmem:[#allocation9 + $0x28] sm:$0xf]
    %v825 = vld [vmem:[#allocation9 + $0x2c] sm:$0xf]
    %v826 = vld [vmem:[#allocation9 + $0x30] sm:$0xf]
    %v827 = vld [vmem:[#allocation9 + $0x34] sm:$0xf]
    %v828 = vld [vmem:[#allocation9 + $0x38] sm:$0xf]
    %v829 = vld [vmem:[#allocation9 + $0x3c] sm:$0xf]
    %v830 = vlaneseq
    %v831 = vshrl.u32 %v830, 7
    %v832 = vsub.s32 2, %v831
    %v833 = vrot.slane %v110, %v832
    %v850 = vunpack.c.l.b16 %v814
    %v851 = vunpack.c.l.b16 %v815
    %v852 = vunpack.c.l.b16 %v816
    %v853 = vunpack.c.l.b16 %v817
    %v854 = vunpack.c.l.b16 %v818
    %v855 = vunpack.c.l.b16 %v819
    %v856 = vunpack.c.l.b16 %v820
    %v857 = vunpack.c.l.b16 %v821
    %v858 = vunpack.c.l.b16 %v822
    %v859 = vunpack.c.l.b16 %v823
    %v860 = vunpack.c.l.b16 %v824
    %v861 = vunpack.c.l.b16 %v825
    %v862 = vunpack.c.l.b16 %v826
    %v863 = vunpack.c.l.b16 %v827
    %v864 = vunpack.c.l.b16 %v828
    %v865 = vunpack.c.l.b16 %v829
    %v866 = vpack.c.b16 %v851, %v850
    %v867 = vpack.c.b16 %v853, %v852
    %v868 = vpack.c.b16 %v855, %v854
    %v869 = vpack.c.b16 %v857, %v856
    %v870 = vpack.c.b16 %v859, %v858
    %v871 = vpack.c.b16 %v861, %v860
    %v872 = vpack.c.b16 %v863, %v862
    %v873 = vpack.c.b16 %v865, %v864
    %882 = vmatprep.subr.bf16.mxu0 0
    %883 = vmatpush1.bf16.msra.mxu0 %v866
    %884 = vmatprep.subr.bf16.mxu0 0
    %885 = vmatpush1.bf16.msra.mxu0 %v867
    %886 = vmatprep.subr.bf16.mxu0 0
    %887 = vmatpush1.bf16.msra.mxu0 %v868
    %888 = vmatprep.subr.bf16.mxu0 0
    %889 = vmatpush1.bf16.msra.mxu0 %v869
    %890 = vmatprep.subr.bf16.mxu0 0
    %891 = vmatpush1.bf16.msra.mxu0 %v870
    %892 = vmatprep.subr.bf16.mxu0 0
    %893 = vmatpush1.bf16.msra.mxu0 %v871
    %894 = vmatprep.subr.bf16.mxu0 0
    %895 = vmatpush1.bf16.msra.mxu0 %v872
    %896 = vmatprep.subr.bf16.mxu0 0
    %897 = vmatpush1.bf16.msra.mxu0 %v873
    %898 = vmatprep.subr.bf16.mxu0 0
    %899 = vmatpush1.bf16.msra.mxu0 0
    %900 = vmatprep.subr.bf16.mxu0 0
    %901 = vmatpush1.bf16.msra.mxu0 0
    %902 = vmatprep.subr.bf16.mxu0 0
    %903 = vmatpush1.bf16.msra.mxu0 0
    %904 = vmatprep.subr.bf16.mxu0 0
    %905 = vmatpush1.bf16.msra.mxu0 0
    %906 = vmatprep.subr.bf16.mxu0 0
    %907 = vmatpush1.bf16.msra.mxu0 0
    %908 = vmatprep.subr.bf16.mxu0 0
    %909 = vmatpush1.bf16.msra.mxu0 0
    %910 = vmatprep.subr.bf16.mxu0 0
    %911 = vmatpush1.bf16.msra.mxu0 0
    %912 = vmatprep.subr.bf16.mxu0 0
    %913 = vmatpush1.bf16.msra.mxu0 0
    %914 = vmatprep.mubr.bf16.mxu0 0
    %915 = vmatmul.mubr.bf16.gmra.mrb[0].mxu0 %v813
    %v916 = vpop.f32.mrb[0].mxu0
    %v917 = vadd.f32 %v833, %v916
    %v918 = vpop.f32.mrb[0].mxu0
    %v919 = vpop.f32.mrb[0].mxu0
    %v920 = vpop.f32.mrb[0].mxu0
    %921 = vdwg.mxu0
    %922 = vmax.xlane.f32.xlu0 %v917
    %v923 = vpop.xlane.xlu0 %922
    %v924 = vsub.f32 %v917, %v923
    %v925 = vmul.f32 %v924, 1.442695
    %v926 = vpow.pop %v925
    %927 = vadd.xlane.f32.xlu0 %v926
    %v928 = vpop.xlane.xlu0 %927
    %v929 = vrcp.pop %v928
    %v930 = vmul.f32 %v926, %v929
    %v931 = vlaneseq
    %v932 = vshrl.u32 %v931, 7
    %v933 = vsub.s32 3, %v932
    %v934 = vrot.slane %v110, %v933
    %v935 = vmul.f32 %v812, %v934
    %936 = vadd.xlane.f32.xlu0 %v935
    %v937 = vpop.xlane.xlu0 %936
    %v938 = vlaneseq
    %v939 = vshrl.u32 %v938, 7
    %v940 = vsub.s32 4, %v939
    %v941 = vrot.slane %v110, %v940
    %v942 = vadd.f32 %v937, %v941
    %vm943 = vcmp.gt.f32.partialorder %v110, 0.0
    %v944 = vsel %vm943, 1, 0
    %v945 = vlaneseq
    %v946 = vshrl.u32 %v945, 7
    %v947 = vsub.s32 5, %v946
    %v948 = vrot.slane %v944, %v947
    %vm949 = vcmp.eq.s32.totalorder %v948, 1
    %951 = vset.pattern.permute.xlu0 0
    %952 = vperm.xlu0 %951, %v942
    %v953 = vpop.permute.xlu0 %952
    %v955 = vsel %vm949, %v953, %v930
    %956 = vst [vmem:[%s7] sm:$0xff] %v955
    // Predicated region
    $region54: #{ppo_forward.1} parent=1 // pred_check
      _
    $region55: #{ppo_forward.1} parent=1 // pred_check_branch
      %958 = sbr.rel (0) target = $region57
    $region56: #{ppo_forward.1} parent=1 // pred_region
      _
    $region57: #{ppo_forward.1} parent=1 // pred_fallthru
      _
    // Predicated region
    $region58: #{ppo_forward.1} parent=1 // pred_check
      _
    $region59: #{ppo_forward.1} parent=1 // pred_check_branch
      %960 = sbr.rel (0) target = $region61
    $region60: #{ppo_forward.1} parent=1 // pred_region
      _
    $region61: #{ppo_forward.1} parent=1 // pred_fallthru
      _
    %961 = vsyncpa [#allocation3], 1
    %962 = vsyncpa [#allocation5], 1
    %963 = vsyncpa [#allocation8], 1
    %964 = vsyncpa [#allocation11], 1

</llo_original>
